<compile_context>
chip_gen: v5e
topology: v5e:2x2
jax: 0.10.0
libtpu: 0.0.40
codegen_flags: <defaults>
</compile_context>

<pallas_src>
import math

import jax
import jax.numpy as jnp
from jax import lax
from jax.experimental import pallas as pl
from jax.experimental.pallas import tpu as pltpu

VOCAB = 768            # fixed decoder output size in the PyTorch module
LN_EPS = 1e-12         # BERT-style default layer_norm_eps
_SQRT_HALF = 1.0 / math.sqrt(2.0)


def _round_up(x, m):
    return (x + m - 1) // m * m


def _gelu_exact(x):
    # x * 0.5 * (1 + erf(x / sqrt(2)))  -- matches the PyTorch `gelu` in the spec.
    return x * 0.5 * (1.0 + lax.erf(x * _SQRT_HALF))


def _make_head_kernel(approx_gelu: bool):
    def kernel(x_ref, w1_ref, b1_ref, g_ref, beta_ref, w2_ref, b2_ref, o_ref):
        # x_ref:    [tile_n, H]   bf16 row tile (streamed)
        # w1_ref:   [H, H]        bf16, resident (layout: y = x @ w1 + b1)
        # b1_ref:   [1, H]        f32
        # g_ref:    [1, H]        f32 LayerNorm weight
        # beta_ref: [1, H]        f32 LayerNorm bias
        # w2_ref:   [H, VOCAB]    bf16, resident
        # b2_ref:   [1, VOCAB]    f32 decoder bias (zeros-initialized parameter)
        # o_ref:    [tile_n, VOCAB]
        x = x_ref[...]                                   # already bf16, no VPU cast

        # dense: bf16 MXU operands, f32 accumulation; bias add in f32.
        h = jnp.dot(x, w1_ref[...], preferred_element_type=jnp.float32) + b1_ref[...]

        if approx_gelu:
            # tanh-approx GELU: single EUP transcendental instead of the ~15-op
            # erf VALU polynomial (use only if the accuracy budget allows).
            h = jax.nn.gelu(h, approximate=True)
        else:
            # exact-erf gelu: matches the PyTorch module bit-for-bit in f32 math.
            h = _gelu_exact(h)

        # LayerNorm over last dim (biased variance, torch.nn.LayerNorm semantics).
        # NOTE: H must be the true hidden size here -- padding H without masking
        # would corrupt the mean/var statistics.
        inv_h = 1.0 / h.shape[-1]
        mean = jnp.sum(h, axis=-1, keepdims=True) * inv_h
        centered = h - mean
        var = jnp.sum(centered * centered, axis=-1, keepdims=True) * inv_h
        hn = centered * lax.rsqrt(var + LN_EPS)
        hn = hn * g_ref[...] + beta_ref[...]

        # decoder: Linear(H -> 768) + bias, again bf16 operands / f32 accumulate.
        y = jnp.dot(hn.astype(jnp.bfloat16), w2_ref[...],
                    preferred_element_type=jnp.float32) + b2_ref[...]
        o_ref[...] = y.astype(o_ref.dtype)

    return kernel


def prepare_params(params, compute_dtype=jnp.bfloat16):
    """One-time layout/dtype prep: transpose weights (kernel computes x @ W),
    cast matmul operands to bf16, reshape vectors to [1, D] slabs."""
    H = params["dense_w"].shape[0]
    return {
        "w1_t": jnp.asarray(params["dense_w"].T, compute_dtype),     # [H, H]
        "b1": params["dense_b"].reshape(1, H).astype(jnp.float32),
        "gamma": params["ln_w"].reshape(1, H).astype(jnp.float32),
        "beta": params["ln_b"].reshape(1, H).astype(jnp.float32),
        "w2_t": jnp.asarray(params["dec_w"].T, compute_dtype),       # [H, VOCAB]
        "b2": params["dec_b"].reshape(1, VOCAB).astype(jnp.float32),
    }


def _vmem_capacity_bytes():
    """Generation-aware VMEM capacity (128 MiB v5e/v6e, 64 MiB/TC v7x)."""
    try:
        return int(pltpu.get_tpu_info().vmem_capacity_bytes)
    except Exception:
        return 64 * 1024 * 1024   # conservative fallback (covers v7x per-TC VMEM)


def visual_lm_prediction_head(hidden_states, prepped, *, tile_n=512,
                              out_dtype=jnp.float32, approx_gelu=False):
    """hidden_states: [B, S, H]; prepped: output of prepare_params."""
    B, S, H = hidden_states.shape
    N = B * S
    x2d = hidden_states.reshape(N, H)
    if x2d.dtype != jnp.bfloat16:
        # Stream activations at bf16: halves the per-tile DMA + x-tile VMEM and
        # removes the in-kernel full-tile cast (the MXU consumes bf16 anyway).
        x2d = x2d.astype(jnp.bfloat16)

    w1_t, b1 = prepped["w1_t"], prepped["b1"]
    gamma, beta = prepped["gamma"], prepped["beta"]
    w2_t, b2 = prepped["w2_t"], prepped["b2"]
    out_isize = jnp.dtype(out_dtype).itemsize

    # Row tile: default 512 (multiple of 256 keeps the 256x256 MXU M-dim full on
    # v6e/v7x and amortizes per-grid-step overhead). Clamp for small inputs to a
    # multiple of 16 (bf16 sublane packing). No host-side padding: the last grid
    # step may be a partial block; rows are independent and out-of-bounds rows are
    # masked on writeback, so no padded garbage reaches the real output.
    tile_n = _round_up(max(16, int(tile_n)), 16)
    tile_n = min(tile_n, _round_up(N, 16))

    # VMEM budget. The pipeline double-buffers every blocked operand, including
    # the constant-index resident weights, plus f32 intermediates.
    w_bytes = (w1_t.size * w1_t.dtype.itemsize + w2_t.size * w2_t.dtype.itemsize
               + (b1.size + gamma.size + beta.size + b2.size) * 4)

    def _needed(tn):
        return (2 * w_bytes                       # resident weights (2x buffered)
                + 2 * tn * H * 2                  # double-buffered bf16 x tiles
                + 2 * tn * VOCAB * out_isize      # double-buffered out tiles
                + 3 * tn * max(H, VOCAB) * 4)     # f32 intermediates headroom

    cap = _vmem_capacity_bytes()
    budget = int(cap * 0.85)
    while tile_n > 16 and _needed(tile_n) > budget:
        tile_n = max(16, _round_up(tile_n // 2, 16))
    vmem_limit = int(min(cap, max(_needed(tile_n) + (2 << 20), 32 * 1024 * 1024)))
    # TODO(synk): for very large H (>= ~4096) on v7x the H*H resident weight no
    # longer fits per-TC VMEM; switch W1/W2 to a K-reduction grid axis streaming
    # (tk, H)/(tk, 768) slabs into a f32 accumulator instead of full residency.

    grid = (pl.cdiv(N, tile_n),)

    cost = pl.CostEstimate(
        flops=2 * N * H * (H + VOCAB),
        transcendentals=N * H,                    # erf/tanh in gelu
        bytes_accessed=(N * H * 2 + w_bytes + N * VOCAB * out_isize),
    )

    out = pl.pallas_call(
        _make_head_kernel(approx_gelu),
        out_shape=jax.ShapeDtypeStruct((N, VOCAB), out_dtype),
        grid_spec=pltpu.PrefetchScalarGridSpec(
            num_scalar_prefetch=0,
            grid=grid,
            in_specs=[
                pl.BlockSpec((tile_n, H), lambda i: (i, 0)),     # x row tile (bf16 stream)
                pl.BlockSpec((H, H), lambda i: (0, 0)),          # w1 (resident)
                pl.BlockSpec((1, H), lambda i: (0, 0)),          # b1
                pl.BlockSpec((1, H), lambda i: (0, 0)),          # LN gamma
                pl.BlockSpec((1, H), lambda i: (0, 0)),          # LN beta
                pl.BlockSpec((H, VOCAB), lambda i: (0, 0)),      # w2 (resident)
                pl.BlockSpec((1, VOCAB), lambda i: (0, 0)),      # decoder bias
            ],
            out_specs=pl.BlockSpec((tile_n, VOCAB), lambda i: (i, 0)),
        ),
        compiler_params=pltpu.CompilerParams(
            # Row tiles are independent (no carried accumulator) -> shard across
            # both TensorCores on v7x; harmless on single-TC v5e/v6e.
            dimension_semantics=("parallel",),
            vmem_limit_bytes=vmem_limit,
        ),
        cost_estimate=cost,
    )(x2d, w1_t, b1, gamma, beta, w2_t, b2)

    return out.reshape(B, S, VOCAB)


def init_params(key, hidden_size):
    k1, k2, k3 = jax.random.split(key, 3)
    scale1 = 1.0 / math.sqrt(hidden_size)
    return {
        # nn.Linear(H, H)
        "dense_w": jax.random.uniform(k1, (hidden_size, hidden_size),
                                      jnp.float32, -scale1, scale1),
        "dense_b": jax.random.uniform(k2, (hidden_size,),
                                      jnp.float32, -scale1, scale1),
        # nn.LayerNorm(H): weight=1, bias=0
        "ln_w": jnp.ones((hidden_size,), jnp.float32),
        "ln_b": jnp.zeros((hidden_size,), jnp.float32),
        # nn.Linear(H, 768, bias=False); decoder.bias = zeros(768) parameter
        "dec_w": jax.random.uniform(k3, (VOCAB, hidden_size),
                                    jnp.float32, -scale1, scale1),
        "dec_b": jnp.zeros((VOCAB,), jnp.float32),
    }


def _reference_f32(hidden_states, params):
    """Pure-JAX f32 reference matching the PyTorch module exactly."""
    x = hidden_states
    h = x @ params["dense_w"].T + params["dense_b"]
    h = _gelu_exact(h)
    mean = jnp.mean(h, axis=-1, keepdims=True)
    var = jnp.mean((h - mean) ** 2, axis=-1, keepdims=True)
    h = (h - mean) / jnp.sqrt(var + LN_EPS)
    h = h * params["ln_w"] + params["ln_b"]
    return h @ params["dec_w"].T + params["dec_b"]


def _reference_bf16(hidden_states, params):
    """Mirrors the kernel's bf16-operand / f32-accumulate MXU math."""
    x = hidden_states.astype(jnp.bfloat16)
    w1 = params["dense_w"].T.astype(jnp.bfloat16)
    w2 = params["dec_w"].T.astype(jnp.bfloat16)
    h = jnp.dot(x, w1, preferred_element_type=jnp.float32) + params["dense_b"]
    h = _gelu_exact(h)
    mean = jnp.mean(h, axis=-1, keepdims=True)
    var = jnp.mean((h - mean) ** 2, axis=-1, keepdims=True)
    h = (h - mean) * lax.rsqrt(var + LN_EPS)
    h = h * params["ln_w"] + params["ln_b"]
    return jnp.dot(h.astype(jnp.bfloat16), w2,
                   preferred_element_type=jnp.float32) + params["dec_b"]


if __name__ == "__main__":
    key = jax.random.PRNGKey(0)
    k_x, k_p = jax.random.split(key)

    B, S, H = 2, 8, 32
    hidden_states = jax.random.normal(k_x, (B, S, H), jnp.float32)
    params = init_params(k_p, H)
    prepped = prepare_params(params)   # one-time transpose + bf16 cast

    out = visual_lm_prediction_head(hidden_states, prepped)
    out = jax.block_until_ready(out)
    assert out.shape == (B, S, VOCAB), out.shape

    # Tight check against a reference that uses the same bf16-operand MXU math.
    ref_bf16 = _reference_bf16(hidden_states, params)
    err_bf16 = float(jnp.max(jnp.abs(out - ref_bf16)))
    assert jnp.allclose(out, ref_bf16, atol=2e-3, rtol=2e-3), err_bf16

    # Loose check against the pure-f32 PyTorch-equivalent reference.
    ref_f32 = _reference_f32(hidden_states, params)
    err_f32 = float(jnp.max(jnp.abs(out - ref_f32)))
    assert jnp.allclose(out, ref_f32, atol=5e-2, rtol=5e-2), err_f32

    print("KERNEL_OK")
</pallas_src>

<mosaic_0001>
module attributes {stable_mosaic.version = 11 : i64} {
  func.func @kernel(%arg0: i32, %arg1: memref<16x32xbf16, #tpu.memory_space<vmem>>, %arg2: memref<32x32xbf16, #tpu.memory_space<vmem>>, %arg3: memref<1x32xf32, #tpu.memory_space<vmem>>, %arg4: memref<1x32xf32, #tpu.memory_space<vmem>>, %arg5: memref<1x32xf32, #tpu.memory_space<vmem>>, %arg6: memref<32x768xbf16, #tpu.memory_space<vmem>>, %arg7: memref<1x768xf32, #tpu.memory_space<vmem>>, %arg8: memref<16x768xf32, #tpu.memory_space<vmem>>) attributes {dimension_semantics = [#tpu.dimension_semantics<parallel>], iteration_bounds = array<i64: 1>, scalar_prefetch = 0 : i64, scratch_operands = 0 : i64, tpu.core_type = #tpu.core_type<tc>, window_params = [{transform_indices = @transform_0, window_bounds = array<i64: 16, 32>}, {pipeline_mode = #tpu.pipeline_mode<synchronous>, transform_indices = @transform_1, window_bounds = array<i64: 32, 32>}, {pipeline_mode = #tpu.pipeline_mode<synchronous>, transform_indices = @transform_2, window_bounds = array<i64: 1, 32>}, {pipeline_mode = #tpu.pipeline_mode<synchronous>, transform_indices = @transform_3, window_bounds = array<i64: 1, 32>}, {pipeline_mode = #tpu.pipeline_mode<synchronous>, transform_indices = @transform_4, window_bounds = array<i64: 1, 32>}, {pipeline_mode = #tpu.pipeline_mode<synchronous>, transform_indices = @transform_5, window_bounds = array<i64: 32, 768>}, {pipeline_mode = #tpu.pipeline_mode<synchronous>, transform_indices = @transform_6, window_bounds = array<i64: 1, 768>}, {transform_indices = @transform_7, window_bounds = array<i64: 16, 768>}]} {
    %c0 = arith.constant 0 : index
    %c0_0 = arith.constant 0 : index
    %0 = vector.load %arg1[%c0, %c0_0] : memref<16x32xbf16, #tpu.memory_space<vmem>>, vector<16x32xbf16>
    %c0_1 = arith.constant 0 : index
    %c0_2 = arith.constant 0 : index
    %1 = vector.load %arg2[%c0_1, %c0_2] : memref<32x32xbf16, #tpu.memory_space<vmem>>, vector<32x32xbf16>
    %cst = arith.constant dense<0.000000e+00> : vector<16x32xf32>
    %2 = tpu.matmul %0, %1, %cst {dimension_numbers = #tpu.dot_dimension_numbers<[1], [0], [0], [1], [0, 0, 1, 1], [], []>} : vector<16x32xbf16>, vector<32x32xbf16>, vector<16x32xf32> -> vector<16x32xf32>
    %c0_3 = arith.constant 0 : index
    %c0_4 = arith.constant 0 : index
    %3 = vector.load %arg3[%c0_3, %c0_4] : memref<1x32xf32, #tpu.memory_space<vmem>>, vector<1x32xf32>
    %4 = vector.broadcast %3 : vector<1x32xf32> to vector<16x32xf32>
    %5 = arith.addf %2, %4 : vector<16x32xf32>
    %cst_5 = arith.constant 5.000000e-01 : f32
    %6 = vector.broadcast %cst_5 : f32 to vector<16x32xf32>
    %7 = arith.mulf %5, %6 : vector<16x32xf32>
    %cst_6 = arith.constant 0.707106769 : f32
    %8 = vector.broadcast %cst_6 : f32 to vector<16x32xf32>
    %9 = arith.mulf %5, %8 : vector<16x32xf32>
    %10 = math.erf %9 : vector<16x32xf32>
    %cst_7 = arith.constant 1.000000e+00 : f32
    %11 = vector.broadcast %cst_7 : f32 to vector<16x32xf32>
    %12 = arith.addf %11, %10 : vector<16x32xf32>
    %13 = arith.mulf %7, %12 : vector<16x32xf32>
    %cst_8 = arith.constant dense<0.000000e+00> : vector<16xf32>
    %14 = vector.multi_reduction <add>, %13, %cst_8 [1] : vector<16x32xf32> to vector<16xf32>
    %15 = vector.shape_cast %14 : vector<16xf32> to vector<16x1xf32>
    %cst_9 = arith.constant 3.125000e-02 : f32
    %16 = vector.broadcast %cst_9 : f32 to vector<16x1xf32>
    %17 = arith.mulf %15, %16 : vector<16x1xf32>
    %18 = vector.broadcast %17 : vector<16x1xf32> to vector<16x32xf32>
    %19 = arith.subf %13, %18 : vector<16x32xf32>
    %20 = arith.mulf %19, %19 : vector<16x32xf32>
    %cst_10 = arith.constant dense<0.000000e+00> : vector<16xf32>
    %21 = vector.multi_reduction <add>, %20, %cst_10 [1] : vector<16x32xf32> to vector<16xf32>
    %22 = vector.shape_cast %21 : vector<16xf32> to vector<16x1xf32>
    %cst_11 = arith.constant 3.125000e-02 : f32
    %23 = vector.broadcast %cst_11 : f32 to vector<16x1xf32>
    %24 = arith.mulf %22, %23 : vector<16x1xf32>
    %cst_12 = arith.constant 9.99999996E-13 : f32
    %25 = vector.broadcast %cst_12 : f32 to vector<16x1xf32>
    %26 = arith.addf %24, %25 : vector<16x1xf32>
    %27 = math.rsqrt %26 : vector<16x1xf32>
    %28 = vector.broadcast %27 : vector<16x1xf32> to vector<16x32xf32>
    %29 = arith.mulf %19, %28 : vector<16x32xf32>
    %c0_13 = arith.constant 0 : index
    %c0_14 = arith.constant 0 : index
    %30 = vector.load %arg4[%c0_13, %c0_14] : memref<1x32xf32, #tpu.memory_space<vmem>>, vector<1x32xf32>
    %31 = vector.broadcast %30 : vector<1x32xf32> to vector<16x32xf32>
    %32 = arith.mulf %29, %31 : vector<16x32xf32>
    %c0_15 = arith.constant 0 : index
    %c0_16 = arith.constant 0 : index
    %33 = vector.load %arg5[%c0_15, %c0_16] : memref<1x32xf32, #tpu.memory_space<vmem>>, vector<1x32xf32>
    %34 = vector.broadcast %33 : vector<1x32xf32> to vector<16x32xf32>
    %35 = arith.addf %32, %34 : vector<16x32xf32>
    %36 = arith.truncf %35 : vector<16x32xf32> to vector<16x32xbf16>
    %c0_17 = arith.constant 0 : index
    %c0_18 = arith.constant 0 : index
    %37 = vector.load %arg6[%c0_17, %c0_18] : memref<32x768xbf16, #tpu.memory_space<vmem>>, vector<32x768xbf16>
    %cst_19 = arith.constant dense<0.000000e+00> : vector<16x768xf32>
    %38 = tpu.matmul %36, %37, %cst_19 {dimension_numbers = #tpu.dot_dimension_numbers<[1], [0], [0], [1], [0, 0, 1, 1], [], []>} : vector<16x32xbf16>, vector<32x768xbf16>, vector<16x768xf32> -> vector<16x768xf32>
    %c0_20 = arith.constant 0 : index
    %c0_21 = arith.constant 0 : index
    %39 = vector.load %arg7[%c0_20, %c0_21] : memref<1x768xf32, #tpu.memory_space<vmem>>, vector<1x768xf32>
    %40 = vector.broadcast %39 : vector<1x768xf32> to vector<16x768xf32>
    %41 = arith.addf %38, %40 : vector<16x768xf32>
    %c0_22 = arith.constant 0 : index
    %c0_23 = arith.constant 0 : index
    %42 = vector.load %arg8[%c0_22, %c0_23] : memref<16x768xf32, #tpu.memory_space<vmem>>, vector<16x768xf32>
    tpu.vector_store %arg8[%c0_22, %c0_23], %41 {strides = array<i32>} : memref<16x768xf32, #tpu.memory_space<vmem>>, vector<16x768xf32>,
    return
  }
  func.func @transform_0(%arg0: i32) -> (i32, i32) {
    %c0_i32 = arith.constant 0 : i32
    %c0_i32_0 = arith.constant 0 : i32
    return %arg0, %c0_i32 : i32, i32
  }
  func.func @transform_1(%arg0: i32) -> (i32, i32) {
    %c0_i32 = arith.constant 0 : i32
    %c0_i32_0 = arith.constant 0 : i32
    %c0_i32_1 = arith.constant 0 : i32
    return %c0_i32, %c0_i32_0 : i32, i32
  }
  func.func @transform_2(%arg0: i32) -> (i32, i32) {
    %c0_i32 = arith.constant 0 : i32
    %c0_i32_0 = arith.constant 0 : i32
    %c0_i32_1 = arith.constant 0 : i32
    return %c0_i32, %c0_i32_0 : i32, i32
  }
  func.func @transform_3(%arg0: i32) -> (i32, i32) {
    %c0_i32 = arith.constant 0 : i32
    %c0_i32_0 = arith.constant 0 : i32
    %c0_i32_1 = arith.constant 0 : i32
    return %c0_i32, %c0_i32_0 : i32, i32
  }
  func.func @transform_4(%arg0: i32) -> (i32, i32) {
    %c0_i32 = arith.constant 0 : i32
    %c0_i32_0 = arith.constant 0 : i32
    %c0_i32_1 = arith.constant 0 : i32
    return %c0_i32, %c0_i32_0 : i32, i32
  }
  func.func @transform_5(%arg0: i32) -> (i32, i32) {
    %c0_i32 = arith.constant 0 : i32
    %c0_i32_0 = arith.constant 0 : i32
    %c0_i32_1 = arith.constant 0 : i32
    return %c0_i32, %c0_i32_0 : i32, i32
  }
  func.func @transform_6(%arg0: i32) -> (i32, i32) {
    %c0_i32 = arith.constant 0 : i32
    %c0_i32_0 = arith.constant 0 : i32
    %c0_i32_1 = arith.constant 0 : i32
    return %c0_i32, %c0_i32_0 : i32, i32
  }
  func.func @transform_7(%arg0: i32) -> (i32, i32) {
    %c0_i32 = arith.constant 0 : i32
    %c0_i32_0 = arith.constant 0 : i32
    return %arg0, %c0_i32 : i32, i32
  }
}

</mosaic_0001>

<llo_original>
// kernel: tpu_custom_call.1
$region0: #{tpu_custom_call.1}
  #allocation0 [shape = 'u32[]', space=smem, size = 0x4, offset = 0x4, fixed_abs, tag = 'smem constant byte address 0x4 - core index']
  #allocation1 [shape = 'u32[72,128]{1,0:T(1,128)}', space=vmem, size = 0x9000, scoped, tag = 'internal scratch']
  %s0 = inlined_call_operand.hbm [shape: bf16[16,32], index: 0, kind: input, shape index: {}]
  %s1 = inlined_call_operand.hbm [shape: bf16[32,32], index: 1, kind: input, shape index: {}]
  %s2 = inlined_call_operand.vmem [shape: f32[1,32], index: 2, kind: input, shape index: {}]
  %s3 = inlined_call_operand.vmem [shape: f32[1,32], index: 3, kind: input, shape index: {}]
  %s4 = inlined_call_operand.vmem [shape: f32[1,32], index: 4, kind: input, shape index: {}]
  %s5 = inlined_call_operand.hbm [shape: bf16[32,768], index: 5, kind: input, shape index: {}]
  %s6 = inlined_call_operand.hbm [shape: f32[1,768], index: 6, kind: input, shape index: {}]
  %s7 = inlined_call_operand.hbm [shape: f32[16,768], index: 7, kind: output, shape index: {}]
  %s8 = sld [smem:[#allocation0]]
  $region54: #{tpu_custom_call.1} parent=0
    _
  %s10 = ssub.s32 1, %s8
  %s11 = scalar_select 0, %s10, %s8
  $region1: #{tpu_custom_call.1} parent=0
    #allocation2 [shape = 'u8[4096]{0}', space=vmem, size = 0x1000, scoped, tag = 'input window, operand 0, single buffered']
    #allocation3 [shape = 's32[1]{0}', space=sflag, size = 0x4, scoped, tag = 'scoped memory for tpu_custom_call.1']
    #allocation4 [shape = 's32[1]{0}', space=sflag, size = 0x4, scoped, tag = 'scoped memory for tpu_custom_call.1']
    #allocation5 [shape = 'u8[8192]{0}', space=vmem, size = 0x2000, scoped, tag = 'input window, operand 1, single buffered']
    #allocation6 [shape = 's32[1]{0}', space=sflag, size = 0x4, scoped, tag = 'scoped memory for tpu_custom_call.1']
    #allocation7 [shape = 'u8[49152]{0}', space=vmem, size = 0xc000, scoped, tag = 'input window, operand 5, single buffered']
    #allocation8 [shape = 'u8[3072]{0}', space=vmem, size = 0xc00, scoped, tag = 'input window, operand 6, single buffered']
    #allocation9 [shape = 's32[1]{0}', space=sflag, size = 0x4, scoped, tag = 'scoped memory for tpu_custom_call.1']
    #allocation10 [shape = 'u8[49152]{0}', space=vmem, size = 0xc000, scoped, tag = 'output window, operand 0, single buffered']
    %12 = vsyncpa [#allocation3], 0
    %13 = vsyncpa [#allocation6], 0
    %14 = vsyncpa [#allocation9], 0
    %15 = vsyncpa [#allocation4], 0
    // Predicated region
    $region2: #{tpu_custom_call.1} parent=1 // pred_check
      _
    $region3: #{tpu_custom_call.1} parent=1 // pred_check_branch
      %17 = sbr.rel (0) target = $region5
    $region4: #{tpu_custom_call.1} parent=1 // pred_region
      %19 = vsyncadd [#allocation3], 0
      %s20 = sshll.u32 %s0, 4
      %s21 = int_to_ptr.hbm [resolvable:$true] %s20
      %s22 = sshll.u32 [#allocation2], 4
      %s23 = int_to_ptr.vmem [resolvable:$true] %s22
      %28 = dma.hbm_to_vmem [thread:$0]  %s21, 128, %s23, [#allocation3], 64, 64, 4
    $region5: #{tpu_custom_call.1} parent=1 // pred_fallthru
      _
    // Predicated region
    $region6: #{tpu_custom_call.1} parent=1 // pred_check
      _
    $region7: #{tpu_custom_call.1} parent=1 // pred_check_branch
      %30 = sbr.rel (0) target = $region9
    $region8: #{tpu_custom_call.1} parent=1 // pred_region
      %32 = vsyncadd [#allocation6], 0
      %s33 = sshll.u32 %s1, 4
      %s34 = int_to_ptr.hbm [resolvable:$true] %s33
      %s35 = sshll.u32 [#allocation5], 4
      %s36 = int_to_ptr.vmem [resolvable:$true] %s35
      %41 = dma.hbm_to_vmem [thread:$0]  %s34, 256, %s36, [#allocation6], 64, 64, 4
    $region9: #{tpu_custom_call.1} parent=1 // pred_fallthru
      _
    // Predicated region
    $region10: #{tpu_custom_call.1} parent=1 // pred_check
      _
    $region11: #{tpu_custom_call.1} parent=1 // pred_check_branch
      %43 = sbr.rel (0) target = $region13
    $region12: #{tpu_custom_call.1} parent=1 // pred_region
      _
    $region13: #{tpu_custom_call.1} parent=1 // pred_fallthru
      _
    // Predicated region
    $region14: #{tpu_custom_call.1} parent=1 // pred_check
      _
    $region15: #{tpu_custom_call.1} parent=1 // pred_check_branch
      %45 = sbr.rel (0) target = $region17
    $region16: #{tpu_custom_call.1} parent=1 // pred_region
      _
    $region17: #{tpu_custom_call.1} parent=1 // pred_fallthru
      _
    // Predicated region
    $region18: #{tpu_custom_call.1} parent=1 // pred_check
      _
    $region19: #{tpu_custom_call.1} parent=1 // pred_check_branch
      %47 = sbr.rel (0) target = $region21
    $region20: #{tpu_custom_call.1} parent=1 // pred_region
      _
    $region21: #{tpu_custom_call.1} parent=1 // pred_fallthru
      _
    // Predicated region
    $region22: #{tpu_custom_call.1} parent=1 // pred_check
      _
    $region23: #{tpu_custom_call.1} parent=1 // pred_check_branch
      %49 = sbr.rel (0) target = $region25
    $region24: #{tpu_custom_call.1} parent=1 // pred_region
      %51 = vsyncadd [#allocation6], 0
      %s52 = sshll.u32 %s5, 4
      %s53 = int_to_ptr.hbm [resolvable:$true] %s52
      %s54 = sshll.u32 [#allocation7], 4
      %s55 = int_to_ptr.vmem [resolvable:$true] %s54
      %60 = dma.hbm_to_vmem [thread:$0]  %s53, 1536, %s55, [#allocation6], 384, 384, 24
    $region25: #{tpu_custom_call.1} parent=1 // pred_fallthru
      _
    // Predicated region
    $region26: #{tpu_custom_call.1} parent=1 // pred_check
      _
    $region27: #{tpu_custom_call.1} parent=1 // pred_check_branch
      %62 = sbr.rel (0) target = $region29
    $region28: #{tpu_custom_call.1} parent=1 // pred_region
      %64 = vsyncadd [#allocation9], 0
      %s66 = sshll.u32 %s6, 4
      %s67 = int_to_ptr.hbm [resolvable:$true] %s66
      %s68 = sshll.u32 [#allocation8], 4
      %s69 = int_to_ptr.vmem [resolvable:$true] %s68
      %71 = dma.hbm_to_vmem [thread:$0]  %s67, 96, %s69, [#allocation9]
    $region29: #{tpu_custom_call.1} parent=1 // pred_fallthru
      _
    // Predicated region
    $region30: #{tpu_custom_call.1} parent=1 // pred_check
      _
    $region31: #{tpu_custom_call.1} parent=1 // pred_check_branch
      %73 = sbr.rel (0) target = $region33
    $region32: #{tpu_custom_call.1} parent=1 // pred_region
      %75 = dma.done [#allocation3], 128
    $region33: #{tpu_custom_call.1} parent=1 // pred_fallthru
      _
    // Predicated region
    $region34: #{tpu_custom_call.1} parent=1 // pred_check
      _
    $region35: #{tpu_custom_call.1} parent=1 // pred_check_branch
      %77 = sbr.rel (0) target = $region37
    $region36: #{tpu_custom_call.1} parent=1 // pred_region
      %79 = dma.done [#allocation6], 256
    $region37: #{tpu_custom_call.1} parent=1 // pred_fallthru
      _
    // Predicated region
    $region38: #{tpu_custom_call.1} parent=1 // pred_check
      _
    $region39: #{tpu_custom_call.1} parent=1 // pred_check_branch
      %81 = sbr.rel (0) target = $region41
    $region40: #{tpu_custom_call.1} parent=1 // pred_region
      %83 = dma.done [#allocation6], 1536
    $region41: #{tpu_custom_call.1} parent=1 // pred_fallthru
      _
    // Predicated region
    $region42: #{tpu_custom_call.1} parent=1 // pred_check
      _
    $region43: #{tpu_custom_call.1} parent=1 // pred_check_branch
      %85 = sbr.rel (0) target = $region45
    $region44: #{tpu_custom_call.1} parent=1 // pred_region
      %87 = dma.done [#allocation9], 96
    $region45: #{tpu_custom_call.1} parent=1 // pred_fallthru
      _
    %v89 = vld [vmem:[#allocation2] sm:$0xf]
    %v90 = vld [vmem:[#allocation2 + $0x4] sm:$0xf]
    %v91 = vld [vmem:[#allocation5] sm:$0xf]
    %v92 = vld [vmem:[#allocation5 + $0x4] sm:$0xf]
    %v93 = vld [vmem:[#allocation5 + $0x8] sm:$0xf]
    %v94 = vld [vmem:[#allocation5 + $0xc] sm:$0xf]
    %v95 = vld [vmem:[%s2] sm:$0x1]
    %v97 = vperm.slane %v95, 0
    %v101 = vunpack.c.l.b16 %v89
    %v102 = vunpack.c.l.b16 %v90
    %v103 = vpack.c.b16 %v102, %v101
    %v108 = vunpack.c.l.b16 %v91
    %v109 = vunpack.c.l.b16 %v92
    %v110 = vunpack.c.l.b16 %v93
    %v111 = vunpack.c.l.b16 %v94
    %v112 = vpack.c.b16 %v109, %v108
    %v113 = vpack.c.b16 %v111, %v110
    %vm116 = vcmask 261120
    %v118 = vsel %vm116, %v103, 0
    %120 = vmatpush.bf16.msra.mxu0 0
    %121 = vmatpush.bf16.msra.mxu0 0
    %122 = vmatpush.bf16.msra.mxu0 0
    %123 = vmatpush.bf16.msra.mxu0 0
    %124 = vmatpush.bf16.msra.mxu0 0
    %125 = vmatpush.bf16.msra.mxu0 0
    %126 = vmatpush.bf16.msra.mxu0 %v113
    %127 = vmatpush.bf16.msra.mxu0 %v112
    %128 = vmatmul.bf16.gmra.mxu0 %v118
    %v129 = vpop.f32.mrf.mxu0
    %v130 = vadd.f32 %v97, %v129
    %v131 = vpop.f32.mrf.mxu0
    %v132 = vadd.f32 %v97, %v131
    %133 = vdwg.mxu0
    %v134 = vmul.f32 %v130, 0.5
    %v135 = vmul.f32 %v132, 0.5
    %v136 = vmul.f32 %v130, 0.70710677
    %v137 = vmul.f32 %v132, 0.70710677
    %v138 = vmul.f32 %v136, %v136
    %v139 = vmin.f32 16.0, %v138
    %v140 = vmul.f32 %v139, 2.1237322e-06
    %v141 = vadd.f32 %v140, 0.00028619796
    %v142 = vmul.f32 %v139, %v141
    %v143 = vadd.f32 %v142, 0.0036580483
    %v144 = vmul.f32 %v139, %v143
    %v145 = vadd.f32 %v144, 0.05243302
    %v146 = vmul.f32 %v139, %v145
    %v147 = vadd.f32 %v146, 0.18741608
    %v148 = vmul.f32 %v139, %v147
    %v149 = vadd.f32 %v148, 1.1283791
    %v150 = vmul.f32 %v136, %v149
    %v151 = vmul.f32 %v139, 3.8918573e-05
    %v152 = vadd.f32 %v151, 0.001143296
    %v153 = vmul.f32 %v139, %v152
    %v154 = vadd.f32 %v153, 0.014752088
    %v155 = vmul.f32 %v139, %v154
    %v156 = vadd.f32 %v155, 0.112945676
    %v157 = vmul.f32 %v139, %v156
    %v158 = vadd.f32 %v157, 0.4994258
    %v159 = vmul.f32 %v139, %v158
    %v160 = vadd.f32 %v159, 1.0
    %v161 = vrcp.pop %v160
    %v162 = vmul.f32 %v160, %v161
    %v163 = vsub.f32 1.0, %v162
    %v164 = vmul.f32 %v161, %v163
    %v165 = vadd.f32 %v161, %v164
    %vm166 = vweird.f32 %v160
    %vm167 = vweird.f32 %v161
    %vm168 = vmor %vm166, %vm167
    %v169 = vsel %vm168, %v161, %v165
    %v170 = vand.u32 2147483647, %v160
    %vm171 = vcmp.eq.f32.partialorder %v170, 8.507059e+37
    %v172 = vand.u32 %v160, 2147483648
    %v173 = vor.u32 1.1754944e-38, %v172
    %v174 = vsel %vm171, %v173, %v169
    %v175 = vmul.f32 %v150, %v174
    %v176 = vmin.f32 %v175, 1.0
    %v177 = vmax.f32 %v176, -1.0
    %v178 = vmul.f32 %v137, %v137
    %v179 = vmin.f32 16.0, %v178
    %v180 = vmul.f32 %v179, 2.1237322e-06
    %v181 = vadd.f32 %v180, 0.00028619796
    %v182 = vmul.f32 %v179, %v181
    %v183 = vadd.f32 %v182, 0.0036580483
    %v184 = vmul.f32 %v179, %v183
    %v185 = vadd.f32 %v184, 0.05243302
    %v186 = vmul.f32 %v179, %v185
    %v187 = vadd.f32 %v186, 0.18741608
    %v188 = vmul.f32 %v179, %v187
    %v189 = vadd.f32 %v188, 1.1283791
    %v190 = vmul.f32 %v137, %v189
    %v191 = vmul.f32 %v179, 3.8918573e-05
    %v192 = vadd.f32 %v191, 0.001143296
    %v193 = vmul.f32 %v179, %v192
    %v194 = vadd.f32 %v193, 0.014752088
    %v195 = vmul.f32 %v179, %v194
    %v196 = vadd.f32 %v195, 0.112945676
    %v197 = vmul.f32 %v179, %v196
    %v198 = vadd.f32 %v197, 0.4994258
    %v199 = vmul.f32 %v179, %v198
    %v200 = vadd.f32 %v199, 1.0
    %v201 = vrcp.pop %v200
    %v202 = vmul.f32 %v200, %v201
    %v203 = vsub.f32 1.0, %v202
    %v204 = vmul.f32 %v201, %v203
    %v205 = vadd.f32 %v201, %v204
    %vm206 = vweird.f32 %v200
    %vm207 = vweird.f32 %v201
    %vm208 = vmor %vm206, %vm207
    %v209 = vsel %vm208, %v201, %v205
    %v210 = vand.u32 2147483647, %v200
    %vm211 = vcmp.eq.f32.partialorder %v210, 8.507059e+37
    %v212 = vand.u32 %v200, 2147483648
    %v213 = vor.u32 1.1754944e-38, %v212
    %v214 = vsel %vm211, %v213, %v209
    %v215 = vmul.f32 %v190, %v214
    %v216 = vmin.f32 %v215, 1.0
    %v217 = vmax.f32 %v216, -1.0
    %v218 = vadd.f32 %v177, 1.0
    %v219 = vadd.f32 %v217, 1.0
    %v220 = vmul.f32 %v134, %v218
    %v221 = vmul.f32 %v135, %v219
    %v222 = vsel %vm116, %v220, 0.0
    %223 = vadd.xlane.f32.xlu0 %v222
    %v224 = vpop.xlane.xlu0 %223
    %v225 = vsel %vm116, %v221, 0.0
    %226 = vadd.xlane.f32.xlu0 %v225
    %v227 = vpop.xlane.xlu0 %226
    %v228 = vmul.f32 %v224, 0.03125
    %v229 = vmul.f32 %v227, 0.03125
    %v230 = vsub.f32 %v220, %v228
    %v231 = vsub.f32 %v221, %v229
    %v232 = vmul.f32 %v230, %v230
    %v233 = vmul.f32 %v231, %v231
    %v234 = vsel %vm116, %v232, 0.0
    %235 = vadd.xlane.f32.xlu0 %v234
    %v236 = vpop.xlane.xlu0 %235
    %v237 = vsel %vm116, %v233, 0.0
    %238 = vadd.xlane.f32.xlu0 %v237
    %v239 = vpop.xlane.xlu0 %238
    %v240 = vmul.f32 %v236, 0.03125
    %v241 = vmul.f32 %v239, 0.03125
    %v242 = vadd.f32 %v240, 1e-12
    %v243 = vadd.f32 %v241, 1e-12
    %v244 = vrsqrt.pop %v242
    %v245 = vmul.f32 %v244, %v242
    %v246 = vmul.f32 %v245, %v244
    %v247 = vmul.f32 0.5, %v246
    %v248 = vsub.f32 1.5, %v247
    %v249 = vmul.f32 %v244, %v248
    %vm250 = vweird.f32 %v242
    %vm251 = vweird.f32 %v244
    %vm252 = vmor %vm250, %vm251
    %v253 = vsel %vm252, %v244, %v249
    %v254 = vrsqrt.pop %v243
    %v255 = vmul.f32 %v254, %v243
    %v256 = vmul.f32 %v255, %v254
    %v257 = vmul.f32 0.5, %v256
    %v258 = vsub.f32 1.5, %v257
    %v259 = vmul.f32 %v254, %v258
    %vm260 = vweird.f32 %v243
    %vm261 = vweird.f32 %v254
    %vm262 = vmor %vm260, %vm261
    %v263 = vsel %vm262, %v254, %v259
    %v264 = vmul.f32 %v230, %v253
    %v265 = vmul.f32 %v231, %v263
    %v266 = vld [vmem:[%s3] sm:$0x1]
    %v268 = vperm.slane %v266, 0
    %v270 = vmul.f32 %v264, %v268
    %v271 = vmul.f32 %v265, %v268
    %v272 = vld [vmem:[%s4] sm:$0x1]
    %v274 = vperm.slane %v272, 0
    %v276 = vadd.f32 %v270, %v274
    %v277 = vadd.f32 %v271, %v274
    %v278 = vpack.c.bf16 %v277, %v276
    %v279 = vld [vmem:[#allocation7] sm:$0xff]
    %v280 = vld [vmem:[#allocation7 + $0x8] sm:$0xff]
    %v281 = vld [vmem:[#allocation7 + $0x10] sm:$0xff]
    %v282 = vld [vmem:[#allocation7 + $0x18] sm:$0xff]
    %v283 = vld [vmem:[#allocation7 + $0x20] sm:$0xff]
    %v284 = vld [vmem:[#allocation7 + $0x28] sm:$0xff]
    %v285 = vld [vmem:[#allocation7 + $0x30] sm:$0xff]
    %v286 = vld [vmem:[#allocation7 + $0x38] sm:$0xff]
    %v287 = vld [vmem:[#allocation7 + $0x40] sm:$0xff]
    %v288 = vld [vmem:[#allocation7 + $0x48] sm:$0xff]
    %v289 = vld [vmem:[#allocation7 + $0x50] sm:$0xff]
    %v290 = vld [vmem:[#allocation7 + $0x58] sm:$0xff]
    %v291 = vld [vmem:[#allocation8] sm:$0x3f]
    %v293 = vperm.slane %v291, 0
    %v294 = vperm.slane %v291, 1
    %v295 = vperm.slane %v291, 2
    %v296 = vperm.slane %v291, 3
    %v297 = vperm.slane %v291, 4
    %v298 = vperm.slane %v291, 5
    %v317 = vunpack.c.l.b16 %v279
    %v318 = vunpack.c.h.b16 %v279
    %v319 = vunpack.c.l.b16 %v280
    %v320 = vunpack.c.h.b16 %v280
    %v321 = vunpack.c.l.b16 %v281
    %v322 = vunpack.c.h.b16 %v281
    %v323 = vunpack.c.l.b16 %v282
    %v324 = vunpack.c.h.b16 %v282
    %v325 = vunpack.c.l.b16 %v283
    %v326 = vunpack.c.h.b16 %v283
    %v327 = vunpack.c.l.b16 %v284
    %v328 = vunpack.c.h.b16 %v284
    %v329 = vunpack.c.l.b16 %v285
    %v330 = vunpack.c.h.b16 %v285
    %v331 = vunpack.c.l.b16 %v286
    %v332 = vunpack.c.h.b16 %v286
    %v333 = vunpack.c.l.b16 %v287
    %v334 = vunpack.c.h.b16 %v287
    %v335 = vunpack.c.l.b16 %v288
    %v336 = vunpack.c.h.b16 %v288
    %v337 = vunpack.c.l.b16 %v289
    %v338 = vunpack.c.h.b16 %v289
    %v339 = vunpack.c.l.b16 %v290
    %v340 = vunpack.c.h.b16 %v290
    %v341 = vpack.c.b16 %v323, %v317
    %v342 = vpack.c.b16 %v324, %v318
    %v343 = vpack.c.b16 %v325, %v319
    %v344 = vpack.c.b16 %v326, %v320
    %v345 = vpack.c.b16 %v327, %v321
    %v346 = vpack.c.b16 %v328, %v322
    %v347 = vpack.c.b16 %v335, %v329
    %v348 = vpack.c.b16 %v336, %v330
    %v349 = vpack.c.b16 %v337, %v331
    %v350 = vpack.c.b16 %v338, %v332
    %v351 = vpack.c.b16 %v339, %v333
    %v352 = vpack.c.b16 %v340, %v334
    %v366 = vsel %vm116, %v278, 0
    %368 = vmatpush.bf16.msra.mxu0 0
    %369 = vmatpush.bf16.msra.mxu0 0
    %370 = vmatpush.bf16.msra.mxu0 0
    %371 = vmatpush.bf16.msra.mxu0 0
    %372 = vmatpush.bf16.msra.mxu0 0
    %373 = vmatpush.bf16.msra.mxu0 0
    %374 = vmatpush.bf16.msra.mxu0 %v347
    %375 = vmatpush.bf16.msra.mxu0 %v341
    %376 = vmatmul.bf16.gmra.mxu0 %v366
    %v377 = vpop.f32.mrf.mxu0
    %v378 = vadd.f32 %v293, %v377
    %v379 = vpop.f32.mrf.mxu0
    %v380 = vadd.f32 %v293, %v379
    %381 = vdwg.mxu0
    %382 = vmatpush.bf16.msra.mxu0 0
    %383 = vmatpush.bf16.msra.mxu0 0
    %384 = vmatpush.bf16.msra.mxu0 0
    %385 = vmatpush.bf16.msra.mxu0 0
    %386 = vmatpush.bf16.msra.mxu0 0
    %387 = vmatpush.bf16.msra.mxu0 0
    %388 = vmatpush.bf16.msra.mxu0 %v348
    %389 = vmatpush.bf16.msra.mxu0 %v342
    %390 = vmatmul.bf16.gmra.mxu0 %v366
    %v391 = vpop.f32.mrf.mxu0
    %v392 = vadd.f32 %v294, %v391
    %v393 = vpop.f32.mrf.mxu0
    %v394 = vadd.f32 %v294, %v393
    %395 = vdwg.mxu0
    %396 = vmatpush.bf16.msra.mxu0 0
    %397 = vmatpush.bf16.msra.mxu0 0
    %398 = vmatpush.bf16.msra.mxu0 0
    %399 = vmatpush.bf16.msra.mxu0 0
    %400 = vmatpush.bf16.msra.mxu0 0
    %401 = vmatpush.bf16.msra.mxu0 0
    %402 = vmatpush.bf16.msra.mxu0 %v349
    %403 = vmatpush.bf16.msra.mxu0 %v343
    %404 = vmatmul.bf16.gmra.mxu0 %v366
    %v405 = vpop.f32.mrf.mxu0
    %v406 = vadd.f32 %v295, %v405
    %v407 = vpop.f32.mrf.mxu0
    %v408 = vadd.f32 %v295, %v407
    %409 = vdwg.mxu0
    %410 = vmatpush.bf16.msra.mxu0 0
    %411 = vmatpush.bf16.msra.mxu0 0
    %412 = vmatpush.bf16.msra.mxu0 0
    %413 = vmatpush.bf16.msra.mxu0 0
    %414 = vmatpush.bf16.msra.mxu0 0
    %415 = vmatpush.bf16.msra.mxu0 0
    %416 = vmatpush.bf16.msra.mxu0 %v350
    %417 = vmatpush.bf16.msra.mxu0 %v344
    %418 = vmatmul.bf16.gmra.mxu0 %v366
    %v419 = vpop.f32.mrf.mxu0
    %v420 = vadd.f32 %v296, %v419
    %v421 = vpop.f32.mrf.mxu0
    %v422 = vadd.f32 %v296, %v421
    %423 = vdwg.mxu0
    %424 = vmatpush.bf16.msra.mxu0 0
    %425 = vmatpush.bf16.msra.mxu0 0
    %426 = vmatpush.bf16.msra.mxu0 0
    %427 = vmatpush.bf16.msra.mxu0 0
    %428 = vmatpush.bf16.msra.mxu0 0
    %429 = vmatpush.bf16.msra.mxu0 0
    %430 = vmatpush.bf16.msra.mxu0 %v351
    %431 = vmatpush.bf16.msra.mxu0 %v345
    %432 = vmatmul.bf16.gmra.mxu0 %v366
    %v433 = vpop.f32.mrf.mxu0
    %v434 = vadd.f32 %v297, %v433
    %v435 = vpop.f32.mrf.mxu0
    %v436 = vadd.f32 %v297, %v435
    %437 = vdwg.mxu0
    %438 = vmatpush.bf16.msra.mxu0 0
    %439 = vmatpush.bf16.msra.mxu0 0
    %440 = vmatpush.bf16.msra.mxu0 0
    %441 = vmatpush.bf16.msra.mxu0 0
    %442 = vmatpush.bf16.msra.mxu0 0
    %443 = vmatpush.bf16.msra.mxu0 0
    %444 = vmatpush.bf16.msra.mxu0 %v352
    %445 = vmatpush.bf16.msra.mxu0 %v346
    %446 = vmatmul.bf16.gmra.mxu0 %v366
    %v447 = vpop.f32.mrf.mxu0
    %v448 = vadd.f32 %v298, %v447
    %v449 = vpop.f32.mrf.mxu0
    %v450 = vadd.f32 %v298, %v449
    %451 = vdwg.mxu0
    %452 = vst [vmem:[#allocation10] sm:$0xff] %v378
    %453 = vst [vmem:[#allocation10 + $0x8] sm:$0xff] %v392
    %454 = vst [vmem:[#allocation10 + $0x10] sm:$0xff] %v406
    %455 = vst [vmem:[#allocation10 + $0x18] sm:$0xff] %v420
    %456 = vst [vmem:[#allocation10 + $0x20] sm:$0xff] %v434
    %457 = vst [vmem:[#allocation10 + $0x28] sm:$0xff] %v448
    %458 = vst [vmem:[#allocation10 + $0x30] sm:$0xff] %v380
    %459 = vst [vmem:[#allocation10 + $0x38] sm:$0xff] %v394
    %460 = vst [vmem:[#allocation10 + $0x40] sm:$0xff] %v408
    %461 = vst [vmem:[#allocation10 + $0x48] sm:$0xff] %v422
    %462 = vst [vmem:[#allocation10 + $0x50] sm:$0xff] %v436
    %463 = vst [vmem:[#allocation10 + $0x58] sm:$0xff] %v450
    // Predicated region
    $region46: #{tpu_custom_call.1} parent=1 // pred_check
      _
    $region47: #{tpu_custom_call.1} parent=1 // pred_check_branch
      %465 = sbr.rel (0) target = $region49
    $region48: #{tpu_custom_call.1} parent=1 // pred_region
      %467 = vsyncadd [#allocation4], 0
      %s468 = sshll.u32 [#allocation10], 4
      %s469 = int_to_ptr.vmem [resolvable:$true] %s468
      %s470 = sshll.u32 %s7, 4
      %s471 = int_to_ptr.hbm [resolvable:$true] %s470
      %476 = dma.vmem_to_hbm [thread:$0]  %s469, 1536, %s471, [#allocation4], 768, 768, 48
    $region49: #{tpu_custom_call.1} parent=1 // pred_fallthru
      _
    // Predicated region
    $region50: #{tpu_custom_call.1} parent=1 // pred_check
      _
    $region51: #{tpu_custom_call.1} parent=1 // pred_check_branch
      %478 = sbr.rel (0) target = $region53
    $region52: #{tpu_custom_call.1} parent=1 // pred_region
      %480 = dma.done [#allocation4], 1536
    $region53: #{tpu_custom_call.1} parent=1 // pred_fallthru
      _
    %481 = vsyncpa [#allocation3], 1
    %482 = vsyncpa [#allocation6], 1
    %483 = vsyncpa [#allocation9], 1
    %484 = vsyncpa [#allocation4], 1

</llo_original>
